<compile_context>
chip_gen: v6e
topology: v6e:2x2x1
jax: 0.10.0
libtpu: 0.0.40
codegen_flags: <defaults>
</compile_context>

<pallas_src>
import functools

import jax
import jax.numpy as jnp
from jax.experimental import pallas as pl
from jax.experimental.pallas import tpu as pltpu


def _ce_online_lse_kernel(logits_ref, targets_ref, out_ref, m_sc, s_sc, g_sc, *,
                          row_tile, vocab_tile, total_n, ignore_index):
    """Online-LSE cross-entropy partial sum for one (row block, vocab block)."""
    i = pl.program_id(0)          # row-block index ("parallel")
    j = pl.program_id(1)          # vocab-block index (reduction, "arbitrary")
    nj = pl.num_programs(1)

    @pl.when(j == 0)
    def _():
        m_sc[...] = jnp.full_like(m_sc, -jnp.inf)
        s_sc[...] = jnp.zeros_like(s_sc)
        g_sc[...] = jnp.zeros_like(g_sc)

    xb = logits_ref[...]                                   # (rt, vt) input dtype
    tgt = targets_ref[...]                                 # (rt, 1) int32

    # Lane index within the full vocabulary for this tile: a (1, vt) iota
    # broadcast against (rt, 1) targets — no full-tile iota materialization.
    col = (jax.lax.broadcasted_iota(jnp.int32, (1, vocab_tile), 1)
           + j * vocab_tile)
    onehot = col == tgt                                    # (rt, vt) via broadcast

    # Online log-sum-exp update. Tile max in the input dtype; only the (rt, 1)
    # result is promoted to f32.
    tile_max = jnp.max(xb, axis=-1, keepdims=True).astype(jnp.float32)
    m_new = jnp.maximum(m_sc[...], tile_max)
    # One fused cast+subtract f32 pass over the tile; reused by exp() and the
    # gather so no standalone full-tile f32 copy stays live next to the input.
    xm = xb.astype(jnp.float32) - m_new                    # (rt, vt) f32
    s_sc[...] = (s_sc[...] * jnp.exp(m_sc[...] - m_new)
                 + jnp.sum(jnp.exp(xm), axis=-1, keepdims=True))

    # Accumulate the raw target logit: exactly one match per (valid) row across
    # all vocab tiles, so sum(onehot * xm) plus m_new gated on "target in this
    # tile" reconstructs x[tgt] exactly.
    hit = jnp.sum(jnp.where(onehot, xm, 0.0), axis=-1, keepdims=True)
    in_tile = jnp.logical_and(tgt >= j * vocab_tile, tgt < (j + 1) * vocab_tile)
    g_sc[...] = g_sc[...] + hit + jnp.where(in_tile, m_new, 0.0)
    m_sc[...] = m_new

    @pl.when(j == nj - 1)
    def _():
        nll = m_sc[...] + jnp.log(s_sc[...]) - g_sc[...]   # (rt, 1)
        # Mask rows past the true token count (ragged last row block reads
        # unspecified VMEM) and ignored targets; where() is a true select.
        row = i * row_tile + jax.lax.broadcasted_iota(
            jnp.int32, (row_tile, 1), 0)
        valid = jnp.logical_and(row < total_n, tgt != ignore_index)
        partial = jnp.sum(jnp.where(valid, nll, 0.0))      # f32 scalar
        out_ref[...] = jnp.broadcast_to(partial, (1, 8, 128))


def _choose_tiles(n_rows, vocab, itemsize, device_kind=""):
    """Pick (row_tile, vocab_tile, vmem_limit_bytes) per TPU generation."""
    kind = device_kind.lower()
    if "v7" in kind:       # 64 MiB VMEM/TC, 3.2 TB/s HBM: small blocks are cheap
        target_bytes, vmem_limit = 4 << 20, 32 << 20
    elif "v6" in kind:     # 128 MiB VMEM, 1.4 TB/s: amortize per-step overhead
        target_bytes, vmem_limit = 12 << 20, 64 << 20
    elif "v5" in kind:     # 128 MiB VMEM, 0.82 TB/s
        target_bytes, vmem_limit = 8 << 20, 48 << 20
    else:                  # unknown: conservative defaults
        target_bytes, vmem_limit = 4 << 20, 32 << 20

    # Sublane packing of the input dtype: 8 rows f32, 16 bf16, 32 int8/fp8.
    row_pack = 8 * max(1, 4 // max(1, itemsize))
    row_bytes = vocab * itemsize

    if row_pack * row_bytes <= target_bytes:
        # Full-vocab rows fit the block budget: tile rows only.
        vocab_tile = vocab
        rows = min(1024, target_bytes // row_bytes)
        rows = (rows // row_pack) * row_pack
        row_tile = min(rows, n_rows)
        if "v7" in kind and n_rows >= 2 * row_pack:
            # Prefer an even number of row blocks so the "parallel" axis keeps
            # both v7x TensorCores busy.
            nb = pl.cdiv(n_rows, row_tile)
            if nb % 2 == 1:
                nb += 1
                new_rt = pl.cdiv(pl.cdiv(n_rows, nb), row_pack) * row_pack
                row_tile = max(row_pack, min(row_tile, new_rt))
    else:
        # Large vocabulary: bound block bytes by tiling the lane axis too.
        row_tile = min(row_pack, n_rows)
        vocab_tile = max(
            128, (target_bytes // (row_pack * itemsize) // 128) * 128)
    return row_tile, vocab_tile, vmem_limit


def cross_entropy_pallas(logits, targets, *, ignore_index=-100):
    """Mean cross-entropy over flattened tokens.

    logits:  [N, V] float (f32 or bf16; bf16 halves the HBM read volume)
    targets: [N]    int token ids (ignore_index entries are excluded)
    returns: scalar float32 (matches nn.CrossEntropyLoss(reduction='mean'))
    """
    n, v = logits.shape
    targets2d = targets.astype(jnp.int32).reshape(n, 1)

    # Denominator: non-ignored token count (PyTorch 'mean' semantics; yields
    # NaN when every target is ignored, matching nn.CrossEntropyLoss).
    denom = jnp.sum(targets2d != ignore_index).astype(jnp.float32)

    itemsize = jnp.dtype(logits.dtype).itemsize
    try:
        device_kind = jax.devices()[0].device_kind
    except Exception:
        device_kind = ""
    row_tile, vocab_tile, vmem_limit = _choose_tiles(n, v, itemsize, device_kind)

    # Rare path: vocab tiled and ragged -> pad lanes with a huge negative so the
    # extra columns vanish under exp() and never match a target id.
    v_pad = pl.cdiv(v, vocab_tile) * vocab_tile
    if v_pad != v:
        logits = jnp.pad(logits, ((0, 0), (0, v_pad - v)),
                         constant_values=-1e30)

    num_row_blocks = pl.cdiv(n, row_tile)
    num_vocab_blocks = v_pad // vocab_tile

    kernel = functools.partial(
        _ce_online_lse_kernel, row_tile=row_tile, vocab_tile=vocab_tile,
        total_n=n, ignore_index=ignore_index)

    partials = pl.pallas_call(
        kernel,
        out_shape=jax.ShapeDtypeStruct((num_row_blocks, 8, 128), jnp.float32),
        grid_spec=pltpu.PrefetchScalarGridSpec(
            num_scalar_prefetch=0,
            grid=(num_row_blocks, num_vocab_blocks),
            in_specs=[
                pl.BlockSpec((row_tile, vocab_tile), lambda i, j: (i, j)),
                pl.BlockSpec((row_tile, 1), lambda i, j: (i, 0)),
            ],
            out_specs=pl.BlockSpec((1, 8, 128), lambda i, j: (i, 0, 0)),
            scratch_shapes=[
                pltpu.VMEM((row_tile, 1), jnp.float32),   # running max
                pltpu.VMEM((row_tile, 1), jnp.float32),   # running sum-exp
                pltpu.VMEM((row_tile, 1), jnp.float32),   # raw target logit
            ],
        ),
        compiler_params=pltpu.CompilerParams(
            dimension_semantics=("parallel", "arbitrary"),
            vmem_limit_bytes=vmem_limit,
        ),
    )(logits, targets2d)

    return jnp.sum(partials[:, 0, 0]) / denom


class ValidityAwareLoss:
    """JAX/Pallas port of ValidityAwareLoss (base criterion = CrossEntropyLoss)."""

    def __init__(self, validity_weight=1.0, ignore_index=-100):
        self.validity_weight = validity_weight
        self.ignore_index = ignore_index

    def __call__(self, outputs, targets, validity_mask=None):
        """
        outputs: [batch, seq_len, vocab] logits (f32 or bf16 — do not upcast)
        targets: [batch, seq_len] int token ids
        validity_mask: optional [batch] bool — True where the generated SMILES
            is valid. Replaces the RDKit string check in the reference code.
        """
        b, s, v = outputs.shape
        base_loss = cross_entropy_pallas(
            outputs.reshape(b * s, v), targets.reshape(b * s),
            ignore_index=self.ignore_index)
        if validity_mask is not None:
            # TODO(synk): RDKit SMILES parsing (MoleculeValidator.is_valid_smiles)
            # is host-side string chemistry with no Pallas equivalent; callers
            # supply the per-sample validity booleans instead.
            batch_size = validity_mask.shape[0]
            invalid_count = jnp.sum(
                jnp.logical_not(validity_mask)).astype(jnp.float32)
            validity_penalty = invalid_count / batch_size * 2.0
            total_loss = base_loss + self.validity_weight * validity_penalty
            # Return JAX scalars (no float()) so the call stays jit-traceable.
            return total_loss, {
                "base_loss": base_loss,
                "validity_penalty": validity_penalty,
                "validity_rate": 1.0 - invalid_count / batch_size,
            }
        return base_loss, {"base_loss": base_loss}


if __name__ == "__main__":
    key = jax.random.PRNGKey(0)
    batch, seq_len, vocab = 2, 8, 32

    k_logits, k_tgt, k_valid = jax.random.split(key, 3)
    outputs = jax.random.normal(k_logits, (batch, seq_len, vocab),
                                dtype=jnp.float32)
    targets = jax.random.randint(k_tgt, (batch, seq_len), 0, vocab,
                                 dtype=jnp.int32)
    # Synthetic "validity" results (stand-in for RDKit SMILES checks).
    validity_mask = jax.random.bernoulli(k_valid, 0.5, (batch,))

    loss_fn = ValidityAwareLoss(validity_weight=1.0)
    total_loss, stats = loss_fn(outputs, targets, validity_mask=validity_mask)
    total_loss = jax.block_until_ready(total_loss)

    # Reference check in plain JAX (mean token-level cross-entropy + penalty).
    def ref_ce(logits_f32, tgt):
        lse = jax.nn.logsumexp(logits_f32, axis=-1)
        picked = jnp.take_along_axis(logits_f32, tgt[:, None], axis=-1)[:, 0]
        return jnp.mean(lse - picked)

    flat_logits = outputs.reshape(-1, vocab)
    flat_tgt = targets.reshape(-1)
    invalid = jnp.sum(jnp.logical_not(validity_mask)).astype(jnp.float32)
    penalty = invalid / batch * 2.0
    ref_total = ref_ce(flat_logits, flat_tgt) + 1.0 * penalty
    assert jnp.allclose(total_loss, ref_total, rtol=1e-5, atol=1e-5), (
        total_loss, ref_total)

    # bf16 fast path (halves HBM read volume; f32 LSE math stays in-kernel).
    outputs_bf16 = outputs.astype(jnp.bfloat16)
    bf16_loss, _ = loss_fn(outputs_bf16, targets, validity_mask=validity_mask)
    bf16_loss = jax.block_until_ready(bf16_loss)
    ref_bf16 = ref_ce(outputs_bf16.reshape(-1, vocab).astype(jnp.float32),
                      flat_tgt) + 1.0 * penalty
    assert jnp.allclose(bf16_loss, ref_bf16, rtol=1e-5, atol=1e-5), (
        bf16_loss, ref_bf16)

    print("KERNEL_OK")
</pallas_src>

<mosaic_0001>
module attributes {stable_mosaic.version = 11 : i64} {
  func.func @_ce_online_lse_kernel(%arg0: i32, %arg1: i32, %arg2: memref<16x32xf32, #tpu.memory_space<vmem>>, %arg3: memref<16x1xi32, #tpu.memory_space<vmem>>, %arg4: memref<1x8x128xf32, #tpu.memory_space<vmem>>, %arg5: memref<16x1xf32, #tpu.memory_space<vmem>>, %arg6: memref<16x1xf32, #tpu.memory_space<vmem>>, %arg7: memref<16x1xf32, #tpu.memory_space<vmem>>) attributes {dimension_semantics = [#tpu.dimension_semantics<parallel>, #tpu.dimension_semantics<arbitrary>], iteration_bounds = array<i64: 1, 1>, scalar_prefetch = 0 : i64, scratch_operands = 3 : i64, tpu.core_type = #tpu.core_type<tc>, window_params = [{transform_indices = @transform_0, window_bounds = array<i64: 16, 32>}, {transform_indices = @transform_1, window_bounds = array<i64: 16, 1>}, {transform_indices = @transform_2, window_bounds = array<i64: 1, 8, 128>}]} {
    %c0_i32 = arith.constant 0 : i32
    %0 = arith.cmpi eq, %arg1, %c0_i32 : i32
    %1 = arith.extui %0 : i1 to i32
    %c0_i32_0 = arith.constant 0 : i32
    %2 = arith.cmpi ne, %1, %c0_i32_0 : i32
    scf.if %2 {
      %cst_26 = arith.constant 0xFF800000 : f32
      %50 = vector.broadcast %cst_26 : f32 to vector<16x1xf32>
      %c0_27 = arith.constant 0 : index
      %c0_28 = arith.constant 0 : index
      %51 = vector.load %arg5[%c0_27, %c0_28] : memref<16x1xf32, #tpu.memory_space<vmem>>, vector<16x1xf32>
      tpu.vector_store %arg5[%c0_27, %c0_28], %50 {strides = array<i32>} : memref<16x1xf32, #tpu.memory_space<vmem>>, vector<16x1xf32>,
      %cst_29 = arith.constant 0.000000e+00 : f32
      %52 = vector.broadcast %cst_29 : f32 to vector<16x1xf32>
      %c0_30 = arith.constant 0 : index
      %c0_31 = arith.constant 0 : index
      %53 = vector.load %arg6[%c0_30, %c0_31] : memref<16x1xf32, #tpu.memory_space<vmem>>, vector<16x1xf32>
      tpu.vector_store %arg6[%c0_30, %c0_31], %52 {strides = array<i32>} : memref<16x1xf32, #tpu.memory_space<vmem>>, vector<16x1xf32>,
      %cst_32 = arith.constant 0.000000e+00 : f32
      %54 = vector.broadcast %cst_32 : f32 to vector<16x1xf32>
      %c0_33 = arith.constant 0 : index
      %c0_34 = arith.constant 0 : index
      %55 = vector.load %arg7[%c0_33, %c0_34] : memref<16x1xf32, #tpu.memory_space<vmem>>, vector<16x1xf32>
      tpu.vector_store %arg7[%c0_33, %c0_34], %54 {strides = array<i32>} : memref<16x1xf32, #tpu.memory_space<vmem>>, vector<16x1xf32>,
    } else {
    }
    %c0 = arith.constant 0 : index
    %c0_1 = arith.constant 0 : index
    %3 = vector.load %arg2[%c0, %c0_1] : memref<16x32xf32, #tpu.memory_space<vmem>>, vector<16x32xf32>
    %c0_2 = arith.constant 0 : index
    %c0_3 = arith.constant 0 : index
    %4 = vector.load %arg3[%c0_2, %c0_3] : memref<16x1xi32, #tpu.memory_space<vmem>>, vector<16x1xi32>
    %5 = tpu.iota {dimensions = array<i32: 1>} : vector<1x32xi32>
    %c32_i32 = arith.constant 32 : i32
    %6 = arith.muli %arg1, %c32_i32 : i32
    %7 = vector.broadcast %6 : i32 to vector<1x32xi32>
    %8 = arith.addi %5, %7 : vector<1x32xi32>
    %9 = vector.broadcast %8 : vector<1x32xi32> to vector<16x32xi32>
    %10 = vector.broadcast %4 : vector<16x1xi32> to vector<16x32xi32>
    %11 = arith.cmpi eq, %9, %10 : vector<16x32xi32>
    %cst = arith.constant dense<0xFF800000> : vector<16xf32>
    %12 = vector.multi_reduction <maximumf>, %3, %cst [1] : vector<16x32xf32> to vector<16xf32>
    %13 = vector.shape_cast %12 : vector<16xf32> to vector<16x1xf32>
    %c0_4 = arith.constant 0 : index
    %c0_5 = arith.constant 0 : index
    %14 = vector.load %arg5[%c0_4, %c0_5] : memref<16x1xf32, #tpu.memory_space<vmem>>, vector<16x1xf32>
    %15 = arith.maximumf %14, %13 : vector<16x1xf32>
    %16 = vector.broadcast %15 : vector<16x1xf32> to vector<16x32xf32>
    %17 = arith.subf %3, %16 : vector<16x32xf32>
    %c0_6 = arith.constant 0 : index
    %c0_7 = arith.constant 0 : index
    %18 = vector.load %arg6[%c0_6, %c0_7] : memref<16x1xf32, #tpu.memory_space<vmem>>, vector<16x1xf32>
    %c0_8 = arith.constant 0 : index
    %c0_9 = arith.constant 0 : index
    %19 = vector.load %arg5[%c0_8, %c0_9] : memref<16x1xf32, #tpu.memory_space<vmem>>, vector<16x1xf32>
    %20 = arith.subf %19, %15 : vector<16x1xf32>
    %21 = math.exp %20 : vector<16x1xf32>
    %22 = arith.mulf %18, %21 : vector<16x1xf32>
    %23 = math.exp %17 : vector<16x32xf32>
    %cst_10 = arith.constant dense<0.000000e+00> : vector<16xf32>
    %24 = vector.multi_reduction <add>, %23, %cst_10 [1] : vector<16x32xf32> to vector<16xf32>
    %25 = vector.shape_cast %24 : vector<16xf32> to vector<16x1xf32>
    %26 = arith.addf %22, %25 : vector<16x1xf32>
    %c0_11 = arith.constant 0 : index
    %c0_12 = arith.constant 0 : index
    %27 = vector.load %arg6[%c0_11, %c0_12] : memref<16x1xf32, #tpu.memory_space<vmem>>, vector<16x1xf32>
    tpu.vector_store %arg6[%c0_11, %c0_12], %26 {strides = array<i32>} : memref<16x1xf32, #tpu.memory_space<vmem>>, vector<16x1xf32>,
    %cst_13 = arith.constant 0.000000e+00 : f32
    %28 = vector.broadcast %cst_13 : f32 to vector<16x32xf32>
    %29 = arith.select %11, %17, %28 : vector<16x32xi1>, vector<16x32xf32>
    %cst_14 = arith.constant dense<0.000000e+00> : vector<16xf32>
    %30 = vector.multi_reduction <add>, %29, %cst_14 [1] : vector<16x32xf32> to vector<16xf32>
    %31 = vector.shape_cast %30 : vector<16xf32> to vector<16x1xf32>
    %c32_i32_15 = arith.constant 32 : i32
    %32 = arith.muli %arg1, %c32_i32_15 : i32
    %33 = vector.broadcast %32 : i32 to vector<16x1xi32>
    %34 = arith.cmpi sge, %4, %33 : vector<16x1xi32>
    %c1_i32 = arith.constant 1 : i32
    %35 = arith.addi %arg1, %c1_i32 : i32
    %c32_i32_16 = arith.constant 32 : i32
    %36 = arith.muli %35, %c32_i32_16 : i32
    %37 = vector.broadcast %36 : i32 to vector<16x1xi32>
    %38 = arith.cmpi slt, %4, %37 : vector<16x1xi32>
    %39 = arith.andi %34, %38 : vector<16x1xi1>
    %c0_17 = arith.constant 0 : index
    %c0_18 = arith.constant 0 : index
    %40 = vector.load %arg7[%c0_17, %c0_18] : memref<16x1xf32, #tpu.memory_space<vmem>>, vector<16x1xf32>
    %41 = arith.addf %40, %31 : vector<16x1xf32>
    %cst_19 = arith.constant 0.000000e+00 : f32
    %42 = vector.broadcast %cst_19 : f32 to vector<16x1xf32>
    %43 = arith.select %39, %15, %42 : vector<16x1xi1>, vector<16x1xf32>
    %44 = arith.addf %41, %43 : vector<16x1xf32>
    %c0_20 = arith.constant 0 : index
    %c0_21 = arith.constant 0 : index
    %45 = vector.load %arg7[%c0_20, %c0_21] : memref<16x1xf32, #tpu.memory_space<vmem>>, vector<16x1xf32>
    tpu.vector_store %arg7[%c0_20, %c0_21], %44 {strides = array<i32>} : memref<16x1xf32, #tpu.memory_space<vmem>>, vector<16x1xf32>,
    %c0_22 = arith.constant 0 : index
    %c0_23 = arith.constant 0 : index
    %46 = vector.load %arg5[%c0_22, %c0_23] : memref<16x1xf32, #tpu.memory_space<vmem>>, vector<16x1xf32>
    tpu.vector_store %arg5[%c0_22, %c0_23], %15 {strides = array<i32>} : memref<16x1xf32, #tpu.memory_space<vmem>>, vector<16x1xf32>,
    %c0_i32_24 = arith.constant 0 : i32
    %47 = arith.cmpi eq, %arg1, %c0_i32_24 : i32
    %48 = arith.extui %47 : i1 to i32
    %c0_i32_25 = arith.constant 0 : i32
    %49 = arith.cmpi ne, %48, %c0_i32_25 : i32
    scf.if %49 {
      %c0_26 = arith.constant 0 : index
      %c0_27 = arith.constant 0 : index
      %50 = vector.load %arg5[%c0_26, %c0_27] : memref<16x1xf32, #tpu.memory_space<vmem>>, vector<16x1xf32>
      %c0_28 = arith.constant 0 : index
      %c0_29 = arith.constant 0 : index
      %51 = vector.load %arg6[%c0_28, %c0_29] : memref<16x1xf32, #tpu.memory_space<vmem>>, vector<16x1xf32>
      %52 = math.log %51 : vector<16x1xf32>
      %53 = arith.addf %50, %52 : vector<16x1xf32>
      %c0_30 = arith.constant 0 : index
      %c0_31 = arith.constant 0 : index
      %54 = vector.load %arg7[%c0_30, %c0_31] : memref<16x1xf32, #tpu.memory_space<vmem>>, vector<16x1xf32>
      %55 = arith.subf %53, %54 : vector<16x1xf32>
      %c16_i32 = arith.constant 16 : i32
      %56 = arith.muli %arg0, %c16_i32 : i32
      %57 = tpu.iota {dimensions = array<i32: 0>} : vector<16x1xi32>
      %58 = vector.broadcast %56 : i32 to vector<16x1xi32>
      %59 = arith.addi %58, %57 : vector<16x1xi32>
      %c16_i32_32 = arith.constant 16 : i32
      %60 = vector.broadcast %c16_i32_32 : i32 to vector<16x1xi32>
      %61 = arith.cmpi slt, %59, %60 : vector<16x1xi32>
      %c-100_i32 = arith.constant -100 : i32
      %62 = vector.broadcast %c-100_i32 : i32 to vector<16x1xi32>
      %63 = arith.cmpi ne, %4, %62 : vector<16x1xi32>
      %64 = arith.andi %61, %63 : vector<16x1xi1>
      %cst_33 = arith.constant 0.000000e+00 : f32
      %65 = vector.broadcast %cst_33 : f32 to vector<16x1xf32>
      %66 = arith.select %64, %55, %65 : vector<16x1xi1>, vector<16x1xf32>
      %67 = vector.shape_cast %66 : vector<16x1xf32> to vector<1x16x1xf32>
      %cst_34 = arith.constant dense<0.000000e+00> : vector<1xf32>
      %68 = vector.multi_reduction <add>, %67, %cst_34 [1, 2] : vector<1x16x1xf32> to vector<1xf32>
      %69 = vector.shape_cast %68 : vector<1xf32> to vector<1x1x1xf32>
      %70 = vector.extract %69[0, 0, 0] : f32 from vector<1x1x1xf32>
      %71 = vector.broadcast %70 : f32 to vector<1x8x128xf32>
      %c0_35 = arith.constant 0 : index
      %c0_36 = arith.constant 0 : index
      %c0_37 = arith.constant 0 : index
      %72 = vector.load %arg4[%c0_35, %c0_36, %c0_37] : memref<1x8x128xf32, #tpu.memory_space<vmem>>, vector<1x8x128xf32>
      tpu.vector_store %arg4[%c0_35, %c0_36, %c0_37], %71 {strides = array<i32>} : memref<1x8x128xf32, #tpu.memory_space<vmem>>, vector<1x8x128xf32>,
    } else {
    }
    return
  }
  func.func @transform_0(%arg0: i32, %arg1: i32) -> (i32, i32) {
    %c0_i32 = arith.constant 0 : i32
    return %arg0, %arg1 : i32, i32
  }
  func.func @transform_1(%arg0: i32, %arg1: i32) -> (i32, i32) {
    %c0_i32 = arith.constant 0 : i32
    %c0_i32_0 = arith.constant 0 : i32
    return %arg0, %c0_i32 : i32, i32
  }
  func.func @transform_2(%arg0: i32, %arg1: i32) -> (i32, i32, i32) {
    %c0_i32 = arith.constant 0 : i32
    %c0_i32_0 = arith.constant 0 : i32
    %c0_i32_1 = arith.constant 0 : i32
    return %arg0, %c0_i32, %c0_i32_0 : i32, i32, i32
  }
}

</mosaic_0001>

<llo_original>
// kernel: tpu_custom_call.1
$region0: #{tpu_custom_call.1}
  #allocation0 [shape = 'u32[]', space=smem, size = 0x4, offset = 0x4, fixed_abs, tag = 'smem constant byte address 0x4 - core index']
  #allocation1 [shape = 'u32[144,128]{1,0:T(1,128)}', space=vmem, size = 0x12000, scoped, tag = 'internal scratch']
  #allocation2 [shape = 'f32[16,1]{1,0:T(8,128)}', space=vmem, size = 0x2000, scoped, tag = 'scratch operand']
  #allocation3 [shape = 'f32[16,1]{1,0:T(8,128)}', space=vmem, size = 0x2000, scoped, tag = 'scratch operand']
  #allocation4 [shape = 'f32[16,1]{1,0:T(8,128)}', space=vmem, size = 0x2000, scoped, tag = 'scratch operand']
  %s0 = inlined_call_operand.vmem [shape: f32[16,32], index: 0, kind: input, shape index: {}]
  %s1 = inlined_call_operand.vmem [shape: s32[16,1], index: 1, kind: input, shape index: {}]
  %s2 = inlined_call_operand.hbm [shape: f32[1,8,128], index: 2, kind: output, shape index: {}]
  %s3 = sld [smem:[#allocation0]]
  $region26: #{tpu_custom_call.1} parent=0
    _
  %s5 = ssub.s32 1, %s3
  %s6 = scalar_select 0, %s5, %s3
  $region1: #{tpu_custom_call.1} parent=0
    #allocation5 [shape = 'u8[4096]{0}', space=vmem, size = 0x1000, scoped, tag = 'output window, operand 0, single buffered']
    #allocation6 [shape = 's32[1]{0}', space=sflag, size = 0x4, scoped, tag = 'scoped memory for tpu_custom_call.1']
    %7 = vsyncpa [#allocation6], 0
    // Predicated region
    $region2: #{tpu_custom_call.1} parent=1 // pred_check
      _
    $region3: #{tpu_custom_call.1} parent=1 // pred_check_branch
      %9 = sbr.rel (0) target = $region5
    $region4: #{tpu_custom_call.1} parent=1 // pred_region
      _
    $region5: #{tpu_custom_call.1} parent=1 // pred_fallthru
      _
    // Predicated region
    $region6: #{tpu_custom_call.1} parent=1 // pred_check
      _
    $region7: #{tpu_custom_call.1} parent=1 // pred_check_branch
      %11 = sbr.rel (0) target = $region9
    $region8: #{tpu_custom_call.1} parent=1 // pred_region
      _
    $region9: #{tpu_custom_call.1} parent=1 // pred_fallthru
      _
    %p12 = scmp.eq.s32.totalorder 0, 0
    // Predicated region
    $region10: #{tpu_custom_call.1} parent=1 // pred_check
      %p13 = pneg %p12
    $region11: #{tpu_custom_call.1} parent=1 // pred_check_branch
      %15 = sbr.rel (%p13) target = $region13
    $region12: #{tpu_custom_call.1} parent=1 // pred_region
      %vm16 = vcmask 7168
      %17 = vst.msk [vmem:[#allocation2] sm:$0xff] %vm16, -inf
      %18 = vst.msk [vmem:[#allocation2 + $0x8] sm:$0xff] %vm16, -inf
      %19 = vst.msk [vmem:[#allocation3] sm:$0xff] %vm16, 0.0
      %20 = vst.msk [vmem:[#allocation3 + $0x8] sm:$0xff] %vm16, 0.0
      %21 = vst.msk [vmem:[#allocation4] sm:$0xff] %vm16, 0.0
      %22 = vst.msk [vmem:[#allocation4 + $0x8] sm:$0xff] %vm16, 0.0
    $region13: #{tpu_custom_call.1} parent=1 // pred_fallthru
      _
    %v23 = vld [vmem:[%s0] sm:$0xff]
    %v24 = vld [vmem:[%s0 + $0x8] sm:$0xff]
    %v25 = vld [vmem:[%s1] sm:$0xff]
    %v26 = vld [vmem:[%s1 + $0x8] sm:$0xff]
    %v27 = vlaneseq
    %v28 = vand.u32 %v27, 127
    %s29 = smul.u32 0, 32
    %v30 = vstv %s29
    %v31 = vadd.s32 %v28, %v30
    %32 = vset.pattern.permute.xlu0 0
    %33 = vperm.xlu0 %32, %v25
    %v34 = vpop.permute.xlu0 %33
    %35 = vset.pattern.permute.xlu0 0
    %36 = vperm.xlu0 %35, %v26
    %v37 = vpop.permute.xlu0 %36
    %vm38 = vcmp.eq.s32.totalorder %v31, %v34
    %vm39 = vcmp.eq.s32.totalorder %v31, %v37
    %vm40 = vcmask 261120
    %v41 = vsel %vm40, %v23, -inf
    %42 = vmax.xlane.f32.xlu0 %v41
    %v43 = vpop.xlane.xlu0 %42
    %v44 = vsel %vm40, %v24, -inf
    %45 = vmax.xlane.f32.xlu0 %v44
    %v46 = vpop.xlane.xlu0 %45
    %v47 = vld [vmem:[#allocation2] sm:$0xff]
    %v48 = vld [vmem:[#allocation2 + $0x8] sm:$0xff]
    %v49 = vmax.f32 %v47, %v43
    %v50 = vmax.f32 %v48, %v46
    %52 = vset.pattern.permute.xlu0 0
    %53 = vperm.xlu0 %52, %v49
    %v54 = vpop.permute.xlu0 %53
    %57 = vset.pattern.permute.xlu0 0
    %58 = vperm.xlu0 %57, %v50
    %v59 = vpop.permute.xlu0 %58
    %v61 = vsub.f32 %v23, %v54
    %v62 = vsub.f32 %v24, %v59
    %v63 = vld [vmem:[#allocation3] sm:$0xff]
    %v64 = vld [vmem:[#allocation3 + $0x8] sm:$0xff]
    %v65 = vsub.f32 %v47, %v49
    %v66 = vsub.f32 %v48, %v50
    %v67 = vmul.f32 %v65, 1.442695
    %v68 = vpow.pop %v67
    %v69 = vmul.f32 %v66, 1.442695
    %v70 = vpow.pop %v69
    %v71 = vmul.f32 %v63, %v68
    %v72 = vmul.f32 %v64, %v70
    %v73 = vmul.f32 %v61, 1.442695
    %v74 = vpow.pop %v73
    %v75 = vmul.f32 %v62, 1.442695
    %v76 = vpow.pop %v75
    %v77 = vsel %vm40, %v74, 0.0
    %78 = vadd.xlane.f32.xlu0 %v77
    %v79 = vpop.xlane.xlu0 %78
    %v80 = vsel %vm40, %v76, 0.0
    %81 = vadd.xlane.f32.xlu0 %v80
    %v82 = vpop.xlane.xlu0 %81
    %v83 = vadd.f32 %v71, %v79
    %v84 = vadd.f32 %v72, %v82
    %vm85 = vcmask 7168
    %86 = vst.msk [vmem:[#allocation3] sm:$0xff] %vm85, %v83
    %87 = vst.msk [vmem:[#allocation3 + $0x8] sm:$0xff] %vm85, %v84
    %v88 = vsel %vm38, %v61, 0.0
    %v89 = vsel %vm39, %v62, 0.0
    %v90 = vsel %vm40, %v88, 0.0
    %91 = vadd.xlane.f32.xlu0 %v90
    %v92 = vpop.xlane.xlu0 %91
    %v93 = vsel %vm40, %v89, 0.0
    %94 = vadd.xlane.f32.xlu0 %v93
    %v95 = vpop.xlane.xlu0 %94
    %vm96 = vcmp.ge.s32.totalorder %v25, %v30
    %vm97 = vcmp.ge.s32.totalorder %v26, %v30
    %s98 = sadd.s32 0, 1
    %s99 = smul.u32 %s98, 32
    %v100 = vstv %s99
    %vm101 = vcmp.lt.s32.totalorder %v25, %v100
    %vm102 = vcmp.lt.s32.totalorder %v26, %v100
    %vm103 = vmand %vm96, %vm101
    %vm104 = vmand %vm97, %vm102
    %v105 = vld [vmem:[#allocation4] sm:$0xff]
    %v106 = vld [vmem:[#allocation4 + $0x8] sm:$0xff]
    %v107 = vadd.f32 %v105, %v92
    %v108 = vadd.f32 %v106, %v95
    %v109 = vsel %vm103, %v49, 0.0
    %v110 = vsel %vm104, %v50, 0.0
    %v111 = vadd.f32 %v107, %v109
    %v112 = vadd.f32 %v108, %v110
    %113 = vst.msk [vmem:[#allocation4] sm:$0xff] %vm85, %v111
    %114 = vst.msk [vmem:[#allocation4 + $0x8] sm:$0xff] %vm85, %v112
    %115 = vst.msk [vmem:[#allocation2] sm:$0xff] %vm85, %v49
    %116 = vst.msk [vmem:[#allocation2 + $0x8] sm:$0xff] %vm85, %v50
    // Predicated region
    $region14: #{tpu_custom_call.1} parent=1 // pred_check
      %p117 = pneg %p12
    $region15: #{tpu_custom_call.1} parent=1 // pred_check_branch
      %119 = sbr.rel (%p117) target = $region17
    $region16: #{tpu_custom_call.1} parent=1 // pred_region
      %v120 = vld [vmem:[#allocation2] sm:$0xff]
      %v121 = vld [vmem:[#allocation2 + $0x8] sm:$0xff]
      %v122 = vld [vmem:[#allocation3] sm:$0xff]
      %v123 = vld [vmem:[#allocation3 + $0x8] sm:$0xff]
      %v124 = vlog2.pop %v122
      %v125 = vmul.f32 %v124, 0.6931472
      %v126 = vlog2.pop %v123
      %v127 = vmul.f32 %v126, 0.6931472
      %v128 = vadd.f32 %v120, %v125
      %v129 = vadd.f32 %v121, %v127
      %v130 = vld [vmem:[#allocation4] sm:$0xff]
      %v131 = vld [vmem:[#allocation4 + $0x8] sm:$0xff]
      %v132 = vsub.f32 %v128, %v130
      %v133 = vsub.f32 %v129, %v131
      %s134 = smul.u32 0, 16
      %v135 = vlaneseq
      %v136 = vshrl.u32 %v135, 7
      %v137 = vadd.s32 %v136, 8
      %v138 = vstv %s134
      %v139 = vadd.s32 %v138, %v136
      %v140 = vadd.s32 %v138, %v137
      %vm141 = vcmp.lt.s32.totalorder %v139, 16
      %vm142 = vcmp.lt.s32.totalorder %v140, 16
      %vm143 = vcmp.ne.s32.totalorder %v25, 4294967196
      %vm144 = vcmp.ne.s32.totalorder %v26, 4294967196
      %vm145 = vmand %vm141, %vm143
      %vm146 = vmand %vm142, %vm144
      %v147 = vsel %vm145, %v132, 0.0
      %v148 = vsel %vm146, %v133, 0.0
      %v149 = vsel %vm85, %v147, 0.0
      %v150 = vsel %vm85, %v148, 0.0
      %v151 = vadd.f32 %v149, %v150
      %152 = vadd.xlane.f32.xlu0 %v151
      %v153 = vpop.xlane.xlu0 %152
      %v154 = vrot.slane %v153, 4
      %v155 = vadd.f32 %v153, %v154
      %v156 = vrot.slane %v155, 2
      %v157 = vadd.f32 %v155, %v156
      %v158 = vrot.slane %v157, 1
      %v159 = vadd.f32 %v157, %v158
      %s160 = vtos %v159
      %v161 = vstv %s160
      %162 = vst [vmem:[#allocation5] sm:$0xff] %v161
    $region17: #{tpu_custom_call.1} parent=1 // pred_fallthru
      _
    // Predicated region
    $region18: #{tpu_custom_call.1} parent=1 // pred_check
      _
    $region19: #{tpu_custom_call.1} parent=1 // pred_check_branch
      %164 = sbr.rel (0) target = $region21
    $region20: #{tpu_custom_call.1} parent=1 // pred_region
      %s166 = ssub.s32 128, 128
      %167 = vsyncadd [#allocation6], %s166
      %s169 = sshll.u32 [#allocation5], 4
      %s170 = int_to_ptr.vmem [resolvable:$true] %s169
      %172 = dma.vmem_to_hbm [thread:$0]  %s170, 128, %s2, [#allocation6]
    $region21: #{tpu_custom_call.1} parent=1 // pred_fallthru
      _
    // Predicated region
    $region22: #{tpu_custom_call.1} parent=1 // pred_check
      _
    $region23: #{tpu_custom_call.1} parent=1 // pred_check_branch
      %174 = sbr.rel (0) target = $region25
    $region24: #{tpu_custom_call.1} parent=1 // pred_region
      %175 = dma.done [#allocation6], 128
    $region25: #{tpu_custom_call.1} parent=1 // pred_fallthru
      _
    %176 = vsyncpa [#allocation6], 1

</llo_original>
